<compile_context>
chip_gen: v6e
topology: v6e:2x2x1
jax: 0.10.0
libtpu: 0.0.40
codegen_flags: <defaults>
</compile_context>

<pallas_src>
import jax
import jax.numpy as jnp
from jax.experimental import pallas as pl
from jax.experimental.pallas import tpu as pltpu

LANE = 128
_VMEM_LIMIT = 32 * 1024 * 1024  # fits v5e/v6e (128 MiB) and v7x (64 MiB phys)


def _round_up(x, m):
    return ((x + m - 1) // m) * m


def _pad2(a, rows, cols):
    return jnp.pad(a, ((0, rows - a.shape[0]), (0, cols - a.shape[1])))


# ---------------------------------------------------------------------------
# Kernel 1: node embedding lookup  h_node = table[x]
#   One-hot (VPU) + MXU matmul against the VMEM-resident table.
# ---------------------------------------------------------------------------
def _node_embed_kernel(x_ref, table_ref, out_ref):
    x = x_ref[...]                                          # [tile_n, 1] int32
    tile_n = x.shape[0]
    s = table_ref.shape[0]
    cols = jax.lax.broadcasted_iota(jnp.int32, (tile_n, s), 1)
    onehot = (x == cols).astype(jnp.float32)                # [tile_n, S]
    out_ref[...] = jnp.dot(
        onehot, table_ref[...], preferred_element_type=jnp.float32
    ).astype(out_ref.dtype)


def node_embedding(x, table, *, max_tile_n=512):
    n = x.shape[0]
    s, d = table.shape
    d_pad = _round_up(d, LANE)
    tile_n = min(max_tile_n, _round_up(n, 8))
    n_pad = _round_up(n, tile_n)

    x2 = jnp.pad(x.astype(jnp.int32).reshape(n, 1), ((0, n_pad - n), (0, 0)))
    table_p = _pad2(table, s, d_pad)

    out = pl.pallas_call(
        _node_embed_kernel,
        out_shape=jax.ShapeDtypeStruct((n_pad, d_pad), jnp.float32),
        grid=(n_pad // tile_n,),
        in_specs=[
            pl.BlockSpec((tile_n, 1), lambda i: (i, 0)),      # streamed ids
            pl.BlockSpec((s, d_pad), lambda i: (0, 0)),       # resident table
        ],
        out_specs=pl.BlockSpec((tile_n, d_pad), lambda i: (i, 0)),
        compiler_params=pltpu.CompilerParams(
            dimension_semantics=("parallel",),
            vmem_limit_bytes=_VMEM_LIMIT,
        ),
    )(x2, table_p)
    return out[:n, :d]


# ---------------------------------------------------------------------------
# Kernel 2: edge MLP  h = SiLU(edge_attr @ W1 + b1) @ W2 + b2
#   W1: [1, D], b1: [1, D], W2: [D, D], b2: [1, D]   (stored [in, out])
# ---------------------------------------------------------------------------
def _edge_mlp_kernel(e_ref, w1_ref, b1_ref, w2_ref, b2_ref, out_ref):
    e = e_ref[...]                                           # [tile_e, 1]
    # Linear(1, D): K == 1 -> broadcast multiply on the VPU (lane-dense).
    h = e * w1_ref[...] + b1_ref[...]                        # [tile_e, D_pad]
    # SiLU via EUP logistic (numerically safe for large |h|).
    h = h * jax.nn.sigmoid(h)
    # Linear(D, D) on the MXU, f32 accumulate.
    out = jnp.dot(h, w2_ref[...], preferred_element_type=jnp.float32)
    out_ref[...] = (out + b2_ref[...]).astype(out_ref.dtype)


def edge_mlp(edge_attr, w1, b1, w2, b2, *, max_tile_e=1024):
    e = edge_attr.shape[0]
    d = w2.shape[1]
    d_pad = _round_up(d, LANE)
    tile_e = min(max_tile_e, _round_up(e, 8))
    e_pad = _round_up(e, tile_e)

    ea = jnp.pad(edge_attr, ((0, e_pad - e), (0, 0)))
    w1p = _pad2(w1, 1, d_pad)
    b1p = _pad2(b1, 1, d_pad)
    w2p = _pad2(w2, d_pad, d_pad)
    b2p = _pad2(b2, 1, d_pad)

    out = pl.pallas_call(
        _edge_mlp_kernel,
        out_shape=jax.ShapeDtypeStruct((e_pad, d_pad), jnp.float32),
        grid=(e_pad // tile_e,),
        in_specs=[
            pl.BlockSpec((tile_e, 1), lambda i: (i, 0)),      # streamed edges
            pl.BlockSpec((1, d_pad), lambda i: (0, 0)),       # resident W1
            pl.BlockSpec((1, d_pad), lambda i: (0, 0)),       # resident b1
            pl.BlockSpec((d_pad, d_pad), lambda i: (0, 0)),   # resident W2
            pl.BlockSpec((1, d_pad), lambda i: (0, 0)),       # resident b2
        ],
        out_specs=pl.BlockSpec((tile_e, d_pad), lambda i: (i, 0)),
        compiler_params=pltpu.CompilerParams(
            dimension_semantics=("parallel",),
            vmem_limit_bytes=_VMEM_LIMIT,
        ),
    )(ea, w1p, b1p, w2p, b2p)
    return out[:e, :d]


# ---------------------------------------------------------------------------
# Encoder wrapper
# ---------------------------------------------------------------------------
def encoder_forward(params, x, edge_attr):
    h_node = node_embedding(x, params["embed_node"])
    h_edge = edge_mlp(
        edge_attr,
        params["edge_w1"], params["edge_b1"],
        params["edge_w2"], params["edge_b2"],
    )
    return h_node, h_edge


def init_params(key, num_species, node_dim, edge_dim):
    k1, k2, k3, k4, k5 = jax.random.split(key, 5)
    return {
        # nn.Embedding(num_species, node_dim)
        "embed_node": jax.random.normal(k1, (num_species, node_dim), jnp.float32),
        # Linear(1, edge_dim) stored as [in, out]
        "edge_w1": jax.random.normal(k2, (1, edge_dim), jnp.float32) * 0.5,
        "edge_b1": jax.random.normal(k3, (1, edge_dim), jnp.float32) * 0.1,
        # Linear(edge_dim, edge_dim)
        "edge_w2": jax.random.normal(k4, (edge_dim, edge_dim), jnp.float32)
        / jnp.sqrt(edge_dim),
        "edge_b2": jax.random.normal(k5, (1, edge_dim), jnp.float32) * 0.1,
    }


def _reference(params, x, edge_attr):
    h_node = params["embed_node"][x]
    h = edge_attr @ params["edge_w1"] + params["edge_b1"]
    h = h * jax.nn.sigmoid(h)
    h_edge = h @ params["edge_w2"] + params["edge_b2"]
    return h_node, h_edge


if __name__ == "__main__":
    num_species, node_dim, edge_dim = 8, 32, 32
    n_nodes, n_edges = 16, 64

    key = jax.random.PRNGKey(0)
    kp, kx, ke = jax.random.split(key, 3)

    params = init_params(kp, num_species, node_dim, edge_dim)
    x = jax.random.randint(kx, (n_nodes,), 0, num_species, dtype=jnp.int32)
    edge_attr = jax.random.normal(ke, (n_edges, 1), jnp.float32)

    h_node, h_edge = encoder_forward(params, x, edge_attr)
    h_node = jax.block_until_ready(h_node)
    h_edge = jax.block_until_ready(h_edge)

    # correctness check against a pure-JAX reference
    ref_node, ref_edge = _reference(params, x, edge_attr)
    assert h_node.shape == (n_nodes, node_dim)
    assert h_edge.shape == (n_edges, edge_dim)
    assert jnp.allclose(h_node, ref_node, atol=1e-5, rtol=1e-5)
    assert jnp.allclose(h_edge, ref_edge, atol=1e-5, rtol=1e-5)

    print("KERNEL_OK")
</pallas_src>

<mosaic_0001>
module attributes {stable_mosaic.version = 11 : i64} {
  func.func @_node_embed_kernel(%arg0: i32, %arg1: memref<16x1xi32, #tpu.memory_space<vmem>>, %arg2: memref<8x128xf32, #tpu.memory_space<vmem>>, %arg3: memref<16x128xf32, #tpu.memory_space<vmem>>) attributes {dimension_semantics = [#tpu.dimension_semantics<parallel>], iteration_bounds = array<i64: 1>, scalar_prefetch = 0 : i64, scratch_operands = 0 : i64, tpu.core_type = #tpu.core_type<tc>, window_params = [{transform_indices = @transform_0, window_bounds = array<i64: 16, 1>}, {pipeline_mode = #tpu.pipeline_mode<synchronous>, transform_indices = @transform_1, window_bounds = array<i64: 8, 128>}, {transform_indices = @transform_2, window_bounds = array<i64: 16, 128>}]} {
    %c0 = arith.constant 0 : index
    %c0_0 = arith.constant 0 : index
    %0 = vector.load %arg1[%c0, %c0_0] : memref<16x1xi32, #tpu.memory_space<vmem>>, vector<16x1xi32>
    %1 = tpu.iota {dimensions = array<i32: 1>} : vector<16x8xi32>
    %2 = vector.broadcast %0 : vector<16x1xi32> to vector<16x8xi32>
    %3 = arith.cmpi eq, %2, %1 : vector<16x8xi32>
    %4 = arith.extui %3 : vector<16x8xi1> to vector<16x8xi32>
    %5 = arith.sitofp %4 : vector<16x8xi32> to vector<16x8xf32>
    %c0_1 = arith.constant 0 : index
    %c0_2 = arith.constant 0 : index
    %6 = vector.load %arg2[%c0_1, %c0_2] : memref<8x128xf32, #tpu.memory_space<vmem>>, vector<8x128xf32>
    %cst = arith.constant dense<0.000000e+00> : vector<16x128xf32>
    %7 = tpu.matmul %5, %6, %cst {dimension_numbers = #tpu.dot_dimension_numbers<[1], [0], [0], [1], [0, 0, 1, 1], [], []>} : vector<16x8xf32>, vector<8x128xf32>, vector<16x128xf32> -> vector<16x128xf32>
    %c0_3 = arith.constant 0 : index
    %c0_4 = arith.constant 0 : index
    %8 = vector.load %arg3[%c0_3, %c0_4] : memref<16x128xf32, #tpu.memory_space<vmem>>, vector<16x128xf32>
    tpu.vector_store %arg3[%c0_3, %c0_4], %7 {strides = array<i32>} : memref<16x128xf32, #tpu.memory_space<vmem>>, vector<16x128xf32>,
    return
  }
  func.func @transform_0(%arg0: i32) -> (i32, i32) {
    %c0_i32 = arith.constant 0 : i32
    %c0_i32_0 = arith.constant 0 : i32
    return %arg0, %c0_i32 : i32, i32
  }
  func.func @transform_1(%arg0: i32) -> (i32, i32) {
    %c0_i32 = arith.constant 0 : i32
    %c0_i32_0 = arith.constant 0 : i32
    %c0_i32_1 = arith.constant 0 : i32
    return %c0_i32, %c0_i32_0 : i32, i32
  }
  func.func @transform_2(%arg0: i32) -> (i32, i32) {
    %c0_i32 = arith.constant 0 : i32
    %c0_i32_0 = arith.constant 0 : i32
    return %arg0, %c0_i32 : i32, i32
  }
}

</mosaic_0001>

<llo_original>
// kernel: tpu_custom_call.1
$region0: #{tpu_custom_call.1}
  #allocation0 [shape = 'u32[]', space=smem, size = 0x4, offset = 0x4, fixed_abs, tag = 'smem constant byte address 0x4 - core index']
  #allocation1 [shape = 'u32[144,128]{1,0:T(1,128)}', space=vmem, size = 0x12000, scoped, tag = 'internal scratch']
  %s0 = inlined_call_operand.vmem [shape: s32[16,1], index: 0, kind: input, shape index: {}]
  %s1 = inlined_call_operand.vmem [shape: f32[8,128], index: 1, kind: input, shape index: {}]
  %s2 = inlined_call_operand.hbm [shape: f32[16,128], index: 2, kind: output, shape index: {}]
  %s3 = sld [smem:[#allocation0]]
  $region18: #{tpu_custom_call.1} parent=0
    _
  %s5 = ssub.s32 1, %s3
  %s6 = scalar_select 0, %s5, %s3
  $region1: #{tpu_custom_call.1} parent=0
    #allocation2 [shape = 'u8[8192]{0}', space=vmem, size = 0x2000, scoped, tag = 'output window, operand 0, single buffered']
    #allocation3 [shape = 's32[1]{0}', space=sflag, size = 0x4, scoped, tag = 'scoped memory for tpu_custom_call.1']
    %7 = vsyncpa [#allocation3], 0
    // Predicated region
    $region2: #{tpu_custom_call.1} parent=1 // pred_check
      _
    $region3: #{tpu_custom_call.1} parent=1 // pred_check_branch
      %9 = sbr.rel (0) target = $region5
    $region4: #{tpu_custom_call.1} parent=1 // pred_region
      _
    $region5: #{tpu_custom_call.1} parent=1 // pred_fallthru
      _
    // Predicated region
    $region6: #{tpu_custom_call.1} parent=1 // pred_check
      _
    $region7: #{tpu_custom_call.1} parent=1 // pred_check_branch
      %11 = sbr.rel (0) target = $region9
    $region8: #{tpu_custom_call.1} parent=1 // pred_region
      _
    $region9: #{tpu_custom_call.1} parent=1 // pred_fallthru
      _
    %v12 = vld [vmem:[%s0] sm:$0xff]
    %v13 = vld [vmem:[%s0 + $0x8] sm:$0xff]
    %v14 = vlaneseq
    %v15 = vand.u32 %v14, 127
    %16 = vset.pattern.permute.xlu0 0
    %17 = vperm.xlu0 %16, %v12
    %v18 = vpop.permute.xlu0 %17
    %19 = vset.pattern.permute.xlu0 0
    %20 = vperm.xlu0 %19, %v13
    %v21 = vpop.permute.xlu0 %20
    %vm22 = vcmp.eq.s32.totalorder %v18, %v15
    %vm23 = vcmp.eq.s32.totalorder %v21, %v15
    %v24 = vsel %vm22, 1, 0
    %v25 = vsel %vm23, 1, 0
    %v26 = vcvt.s32.f32 %v24
    %v27 = vcvt.s32.f32 %v25
    %v28 = vld [vmem:[%s1] sm:$0xff]
    %vm29 = vcmask 64512
    %v31 = vsel %vm29, %v26, 0
    %v34 = vsel %vm29, %v27, 0
    %36 = vmatprep.subr.mxu0 0.0
    %37 = vmatpush1.msra.mxu0 0.0
    %38 = vmatprep.subr.mxu0 0.0
    %39 = vmatpush1.msra.mxu0 0.0
    %40 = vmatprep.subr.mxu0 0.0
    %41 = vmatpush1.msra.mxu0 0.0
    %42 = vmatprep.subr.mxu0 0.0
    %43 = vmatpush1.msra.mxu0 0.0
    %44 = vmatprep.subr.mxu0 0.0
    %45 = vmatpush1.msra.mxu0 0.0
    %46 = vmatprep.subr.mxu0 0.0
    %47 = vmatpush1.msra.mxu0 0.0
    %48 = vmatprep.subr.mxu0 0.0
    %49 = vmatpush1.msra.mxu0 0.0
    %50 = vmatprep.subr.mxu0 0.0
    %51 = vmatpush1.msra.mxu0 0.0
    %52 = vmatprep.subr.mxu0 0.0
    %53 = vmatpush1.msra.mxu0 0.0
    %54 = vmatprep.subr.mxu0 0.0
    %55 = vmatpush1.msra.mxu0 0.0
    %56 = vmatprep.subr.mxu0 0.0
    %57 = vmatpush1.msra.mxu0 0.0
    %58 = vmatprep.subr.mxu0 0.0
    %59 = vmatpush1.msra.mxu0 0.0
    %60 = vmatprep.subr.mxu0 0.0
    %61 = vmatpush1.msra.mxu0 0.0
    %62 = vmatprep.subr.mxu0 0.0
    %63 = vmatpush1.msra.mxu0 0.0
    %64 = vmatprep.subr.mxu0 0.0
    %65 = vmatpush1.msra.mxu0 0.0
    %66 = vmatprep.subr.mxu0 0.0
    %67 = vmatpush1.msra.mxu0 %v28
    %68 = vmatprep.subr.mxu0 0.0
    %69 = vmatpush2.msra.mxu0 0.0
    %70 = vmatprep.subr.mxu0 0.0
    %71 = vmatpush2.msra.mxu0 0.0
    %72 = vmatprep.subr.mxu0 0.0
    %73 = vmatpush2.msra.mxu0 0.0
    %74 = vmatprep.subr.mxu0 0.0
    %75 = vmatpush2.msra.mxu0 0.0
    %76 = vmatprep.subr.mxu0 0.0
    %77 = vmatpush2.msra.mxu0 0.0
    %78 = vmatprep.subr.mxu0 0.0
    %79 = vmatpush2.msra.mxu0 0.0
    %80 = vmatprep.subr.mxu0 0.0
    %81 = vmatpush2.msra.mxu0 0.0
    %82 = vmatprep.subr.mxu0 0.0
    %83 = vmatpush2.msra.mxu0 0.0
    %84 = vmatprep.subr.mxu0 0.0
    %85 = vmatpush2.msra.mxu0 0.0
    %86 = vmatprep.subr.mxu0 0.0
    %87 = vmatpush2.msra.mxu0 0.0
    %88 = vmatprep.subr.mxu0 0.0
    %89 = vmatpush2.msra.mxu0 0.0
    %90 = vmatprep.subr.mxu0 0.0
    %91 = vmatpush2.msra.mxu0 0.0
    %92 = vmatprep.subr.mxu0 0.0
    %93 = vmatpush2.msra.mxu0 0.0
    %94 = vmatprep.subr.mxu0 0.0
    %95 = vmatpush2.msra.mxu0 0.0
    %96 = vmatprep.subr.mxu0 0.0
    %97 = vmatpush2.msra.mxu0 0.0
    %98 = vmatprep.subr.mxu0 0.0
    %99 = vmatpush2.msra.mxu0 0.0
    %100 = vmatprep.mubr.f32.mxu0 0.0
    %101 = vmatmul.mubr.f32.gmra.mxu0 %v31
    %v102 = vpop.f32.mrf.mxu0
    %v103 = vadd.f32 0.0, %v102
    %v104 = vpop.f32.mrf.mxu0
    %105 = vmatprep.mubr.f32.mxu0 0.0
    %106 = vmatmul.mubr.f32.gmra.mxu0 %v34
    %v107 = vpop.f32.mrf.mxu0
    %v108 = vadd.f32 0.0, %v107
    %v109 = vpop.f32.mrf.mxu0
    %110 = vdwg.mxu0
    %111 = vst [vmem:[#allocation2] sm:$0xff] %v103
    %112 = vst [vmem:[#allocation2 + $0x8] sm:$0xff] %v108
    // Predicated region
    $region10: #{tpu_custom_call.1} parent=1 // pred_check
      _
    $region11: #{tpu_custom_call.1} parent=1 // pred_check_branch
      %114 = sbr.rel (0) target = $region13
    $region12: #{tpu_custom_call.1} parent=1 // pred_region
      %s116 = ssub.s32 256, 256
      %117 = vsyncadd [#allocation3], %s116
      %s118 = sshll.u32 [#allocation2], 4
      %s119 = int_to_ptr.vmem [resolvable:$true] %s118
      %124 = dma.vmem_to_hbm [thread:$0]  %s119, 256, %s2, [#allocation3], 128, 128, 8
    $region13: #{tpu_custom_call.1} parent=1 // pred_fallthru
      _
    // Predicated region
    $region14: #{tpu_custom_call.1} parent=1 // pred_check
      _
    $region15: #{tpu_custom_call.1} parent=1 // pred_check_branch
      %126 = sbr.rel (0) target = $region17
    $region16: #{tpu_custom_call.1} parent=1 // pred_region
      %127 = dma.done [#allocation3], 256
    $region17: #{tpu_custom_call.1} parent=1 // pred_fallthru
      _
    %128 = vsyncpa [#allocation3], 1

</llo_original>
